<compile_context>
chip_gen: v7x
topology: tpu7x:2x2x1
jax: 0.10.0
libtpu: 0.0.40
codegen_flags: <defaults>
</compile_context>

<pallas_src>
import math

import jax
import jax.numpy as jnp
from jax import lax
from jax.experimental import pallas as pl
from jax.experimental.pallas import tpu as pltpu


# ----------------------------------------------------------------------------
# small helpers
# ----------------------------------------------------------------------------
def _cdiv(a: int, b: int) -> int:
    return -(-a // b)


def _round_up(a: int, b: int) -> int:
    return _cdiv(a, b) * b


def _pack_factor(d_in: int, d_out: int, lane_target: int = 128,
                 cap: int = 16) -> int:
    """Logical rows per packed physical row so that both packed feature dims
    are multiples of `lane_target` (lane-dense, unmasked stores).

    NOTE: for awkward dims (e.g. 33) this falls back to p=1, which quietly
    reintroduces masked stores; callers with such dims should pad features.
    """
    p_in = lane_target // math.gcd(lane_target, int(d_in))
    p_out = lane_target // math.gcd(lane_target, int(d_out))
    p = (p_in * p_out) // math.gcd(p_in, p_out)
    return p if p <= cap else 1


# ----------------------------------------------------------------------------
# kernel body (static config baked in)
# ----------------------------------------------------------------------------
def _make_mlp_kernel(num_linear, layernorm, activate_output, residual,
                     pack, inv_ln_dim, eps=1e-6):
    """Ref order: x, (w_0, b_0, ..., w_{L-1}, b_{L-1}),
                  [ln_ones (only if pack>1), ln_gamma, ln_beta], out."""
    have_ln = layernorm in ("pre", "post")
    use_ones = have_ln and pack > 1

    def kernel(*refs):
        x_ref = refs[0]
        lin_refs = refs[1:1 + 2 * num_linear]
        idx = 1 + 2 * num_linear
        ones_ref = g_ref = bln_ref = None
        if have_ln:
            if use_ones:
                ones_ref = refs[idx]
                idx += 1
            g_ref = refs[idx]
            bln_ref = refs[idx + 1]
            idx += 2
        o_ref = refs[idx]

        def seg_mean_exact(v):
            # Per-segment (grouped) mean along the lane axis.
            if not use_ones:
                # Plain lane reduction -> XLU slot (MXU stays free).
                return jnp.sum(v, axis=-1, keepdims=True) * inv_ln_dim
            # Block-diagonal ones matrix on the MXU; bf16 hi/lo split keeps
            # the segment sums accurate to ~f32 without any reshapes.
            ones_b = ones_ref[...]
            v_hi = v.astype(jnp.bfloat16)
            v_lo = (v - v_hi.astype(jnp.float32)).astype(jnp.bfloat16)
            s = (jnp.dot(v_hi, ones_b, preferred_element_type=jnp.float32)
                 + jnp.dot(v_lo, ones_b, preferred_element_type=jnp.float32))
            return s * inv_ln_dim

        def seg_mean_fast(v):
            # v is already centered / non-negative and small: a single bf16
            # matmul with f32 accumulation is accurate enough (per review).
            if not use_ones:
                return jnp.sum(v, axis=-1, keepdims=True) * inv_ln_dim
            s = jnp.dot(v.astype(jnp.bfloat16), ones_ref[...],
                        preferred_element_type=jnp.float32)
            return s * inv_ln_dim

        def layer_norm(v):
            mean = seg_mean_exact(v)
            c = v - mean
            var = seg_mean_fast(c * c)
            inv = lax.rsqrt(var + eps)
            return (c * inv * g_ref[...].astype(jnp.float32)
                    + bln_ref[...].astype(jnp.float32))

        x = x_ref[...].astype(jnp.float32)
        if layernorm == "pre":
            x = layer_norm(x)

        for li in range(num_linear):
            w = lin_refs[2 * li][...]                       # bf16 (or f32)
            b = lin_refs[2 * li + 1][...].astype(jnp.float32)
            x = jnp.dot(x.astype(w.dtype), w,
                        preferred_element_type=jnp.float32) + b
            if li < num_linear - 1 or activate_output:
                x = jnp.maximum(x, 0.0)                     # ReLU

        if residual:
            # Re-read the residual operand here instead of keeping it live
            # across LN + all matmuls (x block is resident in VMEM -> cheap).
            x = x + x_ref[...].astype(jnp.float32)
        if layernorm == "post":
            x = layer_norm(x)

        o_ref[...] = x.astype(o_ref.dtype)

    return kernel


# ----------------------------------------------------------------------------
# parameter packing (do this ONCE, outside the hot path)
# ----------------------------------------------------------------------------
def pack_mlp_params(weights, biases, ln_gamma=None, ln_beta=None, *,
                    layernorm=None, activate_output=False, residual=False,
                    compute_dtype=jnp.bfloat16, lane_target=128):
    """Precompute lane-dense (block-diagonal) parameters.

    weights: list of (in, out) matrices (== PyTorch weight.T)
    biases:  list of (out,) vectors
    compute_dtype: dtype of the MXU matmul operands (bf16 default, f32 accum).
    """
    num_linear = len(weights)
    assert len(biases) == num_linear and num_linear >= 1
    dims = [int(weights[0].shape[0])]
    for w in weights:
        assert int(w.shape[0]) == dims[-1]
        dims.append(int(w.shape[1]))
    d_in, d_out = dims[0], dims[-1]
    if residual:
        assert d_out == d_in, "residual=True requires output_size == input_size"
    have_ln = layernorm in ("pre", "post")
    if have_ln:
        assert ln_gamma is not None and ln_beta is not None

    p = _pack_factor(d_in, d_out, lane_target)
    eye_p = jnp.eye(p, dtype=jnp.float32)

    arrays = []
    for w, b in zip(weights, biases):
        w = jnp.asarray(w, jnp.float32)
        b = jnp.asarray(b, jnp.float32)
        wp = (w if p == 1 else jnp.kron(eye_p, w)).astype(compute_dtype)
        bp = jnp.tile(b.reshape(1, -1), (1, p))
        arrays += [wp, bp]

    inv_ln_dim = 1.0
    if have_ln:
        ln_dim = d_in if layernorm == "pre" else d_out
        inv_ln_dim = 1.0 / float(ln_dim)
        if p > 1:
            ones_blk = jnp.kron(eye_p, jnp.ones((ln_dim, ln_dim), jnp.float32))
            arrays.append(ones_blk.astype(jnp.bfloat16))   # 0/1 exact in bf16
        arrays.append(jnp.tile(jnp.asarray(ln_gamma, jnp.float32).reshape(1, -1),
                               (1, p)))
        arrays.append(jnp.tile(jnp.asarray(ln_beta, jnp.float32).reshape(1, -1),
                               (1, p)))

    arrays = [jax.block_until_ready(a) for a in arrays]     # materialize once

    return dict(arrays=arrays, p=p, dims=dims, num_linear=num_linear,
                layernorm=layernorm, activate_output=activate_output,
                residual=residual, inv_ln_dim=inv_ln_dim)


# ----------------------------------------------------------------------------
# forward wrapper
# ----------------------------------------------------------------------------
def mlp_forward(x, params, *, row_tile_packed: int = 512, eps: float = 1e-6):
    """Fused MLP forward. `params` comes from pack_mlp_params()."""
    orig_shape = x.shape
    dims = params["dims"]
    d_in, d_out = dims[0], dims[-1]
    p = params["p"]
    num_linear = params["num_linear"]
    layernorm = params["layernorm"]
    have_ln = layernorm in ("pre", "post")
    assert int(orig_shape[-1]) == d_in

    # ---- native dtype, no f32 upcast ----------------------------------------
    x2 = x.reshape(-1, d_in)
    n = x2.shape[0]
    itemsize = jnp.dtype(x.dtype).itemsize

    # Pad only to a multiple of the pack factor (needed for the packed
    # reshape); no padding to the tile size — the last grid block is ragged.
    n_pad = _round_up(n, p)
    if n_pad != n:
        x2 = jnp.pad(x2, ((0, n_pad - n), (0, 0)))
    n_packed = n_pad // p
    xp = x2.reshape(n_packed, p * d_in)          # lane-dense packed layout

    # ---- row tiling ----------------------------------------------------------
    sub = max(8, 32 // max(itemsize, 1))         # sublane tile for this dtype
    if n_packed <= row_tile_packed:
        tm_p = n_packed                          # full-array block: always legal
    else:
        tm_p = max(sub, (row_tile_packed // sub) * sub)
    grid = (_cdiv(n_packed, tm_p),)

    # ---- specs ---------------------------------------------------------------
    in_arrays = [xp] + list(params["arrays"])
    in_specs = [pl.BlockSpec((tm_p, p * d_in), lambda i: (i, 0))]
    for a in params["arrays"]:
        # Grid-invariant operands (weights/biases/LN params).
        in_specs.append(pl.BlockSpec(a.shape, lambda i: (0, 0)))
    out_specs = pl.BlockSpec((tm_p, p * d_out), lambda i: (i, 0))

    kernel = _make_mlp_kernel(num_linear, layernorm,
                              params["activate_output"], params["residual"],
                              p, params["inv_ln_dim"], eps)

    # ---- advisory cost estimate (logical FLOPs, post-opt bytes) --------------
    flops = 2 * n * sum(a * b for a, b in zip(dims[:-1], dims[1:]))
    param_bytes = sum(int(a.size) * jnp.dtype(a.dtype).itemsize
                      for a in params["arrays"])
    bytes_accessed = (n * d_in * itemsize + n * d_out * itemsize + param_bytes)
    transcendentals = n if have_ln else 0

    # ---- VMEM limit from actual block sizes, capped below physical VMEM -----
    max_d = max(dims)
    need = (2 * tm_p * p * d_in * itemsize          # double-buffered x blocks
            + 2 * tm_p * p * d_out * itemsize       # double-buffered out blocks
            + 2 * param_bytes                       # grid-invariant params
            + (num_linear + 4) * tm_p * p * max_d * 4)   # f32 intermediates
    need = 2 * int(need) + (4 << 20)                # generous headroom
    try:
        phys = int(pltpu.get_tpu_info().vmem_capacity_bytes)
    except Exception:
        phys = 128 << 20
    vmem_limit = int(min(max(need, 32 << 20), (3 * phys) // 4))

    out = pl.pallas_call(
        kernel,
        out_shape=jax.ShapeDtypeStruct((n_packed, p * d_out), x.dtype),
        grid=grid,
        in_specs=in_specs,
        out_specs=out_specs,
        compiler_params=pltpu.CompilerParams(
            dimension_semantics=("parallel",),
            vmem_limit_bytes=vmem_limit),
        cost_estimate=pl.CostEstimate(flops=int(flops),
                                      transcendentals=int(transcendentals),
                                      bytes_accessed=int(bytes_accessed)),
    )(*in_arrays)

    out = out.reshape(n_pad, d_out)[:n]
    return out.reshape(orig_shape[:-1] + (d_out,))


# ----------------------------------------------------------------------------
# parameter init (mirrors the PyTorch module) and a plain-JAX reference
# ----------------------------------------------------------------------------
def xavier_uniform(key, shape, dtype=jnp.float32):
    fan_in, fan_out = shape
    limit = (6.0 / (fan_in + fan_out)) ** 0.5
    return jax.random.uniform(key, shape, dtype, minval=-limit, maxval=limit)


def init_mlp_params(key, input_size, hidden_size, output_size,
                    num_hidden_layers=1, layernorm=None):
    dims = [input_size] + [hidden_size] * num_hidden_layers + [output_size]
    weights, biases = [], []
    for i in range(len(dims) - 1):
        key, kw, kb = jax.random.split(key, 3)
        weights.append(xavier_uniform(kw, (dims[i], dims[i + 1])))
        bound = 1.0 / (dims[i] ** 0.5)          # PyTorch Linear bias init
        biases.append(jax.random.uniform(kb, (dims[i + 1],), jnp.float32,
                                         minval=-bound, maxval=bound))
    ln_gamma = ln_beta = None
    if layernorm == "pre":
        ln_gamma = jnp.ones((input_size,), jnp.float32)
        ln_beta = jnp.zeros((input_size,), jnp.float32)
    elif layernorm == "post":
        ln_gamma = jnp.ones((output_size,), jnp.float32)
        ln_beta = jnp.zeros((output_size,), jnp.float32)
    return weights, biases, ln_gamma, ln_beta


def mlp_reference(x, weights, biases, ln_gamma, ln_beta, *, layernorm,
                  activate_output, residual, eps=1e-6,
                  compute_dtype=jnp.float32):
    def ln(v, g, b):
        m = jnp.mean(v, axis=-1, keepdims=True)
        c = v - m
        var = jnp.mean(c * c, axis=-1, keepdims=True)
        return c * lax.rsqrt(var + eps) * g + b

    h = x.astype(jnp.float32)
    x0 = h
    if layernorm == "pre":
        h = ln(h, ln_gamma, ln_beta)
    for i, (w, b) in enumerate(zip(weights, biases)):
        h = jnp.dot(h.astype(compute_dtype), w.astype(compute_dtype),
                    preferred_element_type=jnp.float32) + b
        if i < len(weights) - 1 or activate_output:
            h = jnp.maximum(h, 0.0)
    if residual:
        h = h + x0
    if layernorm == "post":
        h = ln(h, ln_gamma, ln_beta)
    return h


# ----------------------------------------------------------------------------
# demo / self-test
# ----------------------------------------------------------------------------
if __name__ == "__main__":
    key = jax.random.PRNGKey(0)

    # ---------------- config A: narrow dims (packed p=4), pre-LN + residual --
    input_size, hidden_size, output_size = 32, 64, 32
    layernorm, residual, activate_output = "pre", True, False
    batch, seq = 2, 32                                   # 64 token rows

    key, kx, kp = jax.random.split(key, 3)
    x = jax.random.normal(kx, (batch, seq, input_size), jnp.float32)
    weights, biases, ln_g, ln_b = init_mlp_params(
        kp, input_size, hidden_size, output_size,
        num_hidden_layers=1, layernorm=layernorm)

    # f32 MXU operands
    params_f32 = pack_mlp_params(weights, biases, ln_g, ln_b,
                                 layernorm=layernorm,
                                 activate_output=activate_output,
                                 residual=residual,
                                 compute_dtype=jnp.float32)
    out_f32 = jax.block_until_ready(mlp_forward(x, params_f32))
    ref_f32 = mlp_reference(x, weights, biases, ln_g, ln_b,
                            layernorm=layernorm,
                            activate_output=activate_output,
                            residual=residual, compute_dtype=jnp.float32)
    assert out_f32.shape == (batch, seq, output_size)
    assert jnp.allclose(out_f32, ref_f32, atol=2e-2, rtol=2e-2), float(
        jnp.max(jnp.abs(out_f32 - ref_f32)))

    # bf16 input + bf16 MXU operands (half-width HBM traffic end-to-end)
    x_bf16 = x.astype(jnp.bfloat16)
    params_bf16 = pack_mlp_params(weights, biases, ln_g, ln_b,
                                  layernorm=layernorm,
                                  activate_output=activate_output,
                                  residual=residual,
                                  compute_dtype=jnp.bfloat16)
    out_bf16 = jax.block_until_ready(mlp_forward(x_bf16, params_bf16))
    ref_bf16 = mlp_reference(x_bf16, weights, biases, ln_g, ln_b,
                             layernorm=layernorm,
                             activate_output=activate_output,
                             residual=residual, compute_dtype=jnp.bfloat16)
    assert out_bf16.dtype == jnp.bfloat16
    assert out_bf16.shape == (batch, seq, output_size)
    assert jnp.allclose(out_bf16.astype(jnp.float32), ref_bf16,
                        atol=8e-2, rtol=8e-2), float(
        jnp.max(jnp.abs(out_bf16.astype(jnp.float32) - ref_bf16)))

    # ---------------- config B: p == 1 path (dims already multiples of 128) --
    in_b, hid_b, out_b = 128, 128, 128
    key, kx2, kp2 = jax.random.split(key, 3)
    xb = jax.random.normal(kx2, (batch, seq, in_b), jnp.float32)
    wb, bb, gb, betab = init_mlp_params(kp2, in_b, hid_b, out_b,
                                        num_hidden_layers=1, layernorm="post")
    params_b = pack_mlp_params(wb, bb, gb, betab, layernorm="post",
                               activate_output=True, residual=False,
                               compute_dtype=jnp.float32)
    out_b_arr = jax.block_until_ready(mlp_forward(xb, params_b))
    ref_b = mlp_reference(xb, wb, bb, gb, betab, layernorm="post",
                          activate_output=True, residual=False,
                          compute_dtype=jnp.float32)
    assert out_b_arr.shape == (batch, seq, out_b)
    assert jnp.allclose(out_b_arr, ref_b, atol=5e-3, rtol=5e-3), float(
        jnp.max(jnp.abs(out_b_arr - ref_b)))

    print("KERNEL_OK")
</pallas_src>

<mosaic_0001>
module attributes {stable_mosaic.version = 11 : i64} {
  func.func @kernel(%arg0: i32, %arg1: memref<16x128xf32, #tpu.memory_space<vmem>>, %arg2: memref<128x256xf32, #tpu.memory_space<vmem>>, %arg3: memref<1x256xf32, #tpu.memory_space<vmem>>, %arg4: memref<256x128xf32, #tpu.memory_space<vmem>>, %arg5: memref<1x128xf32, #tpu.memory_space<vmem>>, %arg6: memref<128x128xbf16, #tpu.memory_space<vmem>>, %arg7: memref<1x128xf32, #tpu.memory_space<vmem>>, %arg8: memref<1x128xf32, #tpu.memory_space<vmem>>, %arg9: memref<16x128xf32, #tpu.memory_space<vmem>>) attributes {dimension_semantics = [#tpu.dimension_semantics<parallel>], iteration_bounds = array<i64: 1>, scalar_prefetch = 0 : i64, scratch_operands = 0 : i64, tpu.core_type = #tpu.core_type<tc>, window_params = [{transform_indices = @transform_0, window_bounds = array<i64: 16, 128>}, {pipeline_mode = #tpu.pipeline_mode<synchronous>, transform_indices = @transform_1, window_bounds = array<i64: 128, 256>}, {pipeline_mode = #tpu.pipeline_mode<synchronous>, transform_indices = @transform_2, window_bounds = array<i64: 1, 256>}, {pipeline_mode = #tpu.pipeline_mode<synchronous>, transform_indices = @transform_3, window_bounds = array<i64: 256, 128>}, {pipeline_mode = #tpu.pipeline_mode<synchronous>, transform_indices = @transform_4, window_bounds = array<i64: 1, 128>}, {pipeline_mode = #tpu.pipeline_mode<synchronous>, transform_indices = @transform_5, window_bounds = array<i64: 128, 128>}, {pipeline_mode = #tpu.pipeline_mode<synchronous>, transform_indices = @transform_6, window_bounds = array<i64: 1, 128>}, {pipeline_mode = #tpu.pipeline_mode<synchronous>, transform_indices = @transform_7, window_bounds = array<i64: 1, 128>}, {transform_indices = @transform_8, window_bounds = array<i64: 16, 128>}]} {
    %c0 = arith.constant 0 : index
    %c0_0 = arith.constant 0 : index
    %0 = vector.load %arg1[%c0, %c0_0] : memref<16x128xf32, #tpu.memory_space<vmem>>, vector<16x128xf32>
    %c0_1 = arith.constant 0 : index
    %c0_2 = arith.constant 0 : index
    %1 = vector.load %arg6[%c0_1, %c0_2] : memref<128x128xbf16, #tpu.memory_space<vmem>>, vector<128x128xbf16>
    %2 = arith.truncf %0 : vector<16x128xf32> to vector<16x128xbf16>
    %3 = arith.extf %2 : vector<16x128xbf16> to vector<16x128xf32>
    %4 = arith.subf %0, %3 : vector<16x128xf32>
    %5 = arith.truncf %4 : vector<16x128xf32> to vector<16x128xbf16>
    %cst = arith.constant dense<0.000000e+00> : vector<16x128xf32>
    %6 = tpu.matmul %2, %1, %cst {dimension_numbers = #tpu.dot_dimension_numbers<[1], [0], [0], [1], [0, 0, 1, 1], [], []>} : vector<16x128xbf16>, vector<128x128xbf16>, vector<16x128xf32> -> vector<16x128xf32>
    %cst_3 = arith.constant dense<0.000000e+00> : vector<16x128xf32>
    %7 = tpu.matmul %5, %1, %cst_3 {dimension_numbers = #tpu.dot_dimension_numbers<[1], [0], [0], [1], [0, 0, 1, 1], [], []>} : vector<16x128xbf16>, vector<128x128xbf16>, vector<16x128xf32> -> vector<16x128xf32>
    %8 = arith.addf %6, %7 : vector<16x128xf32>
    %cst_4 = arith.constant 3.125000e-02 : f32
    %9 = vector.broadcast %cst_4 : f32 to vector<16x128xf32>
    %10 = arith.mulf %8, %9 : vector<16x128xf32>
    %11 = arith.subf %0, %10 : vector<16x128xf32>
    %12 = arith.mulf %11, %11 : vector<16x128xf32>
    %13 = arith.truncf %12 : vector<16x128xf32> to vector<16x128xbf16>
    %c0_5 = arith.constant 0 : index
    %c0_6 = arith.constant 0 : index
    %14 = vector.load %arg6[%c0_5, %c0_6] : memref<128x128xbf16, #tpu.memory_space<vmem>>, vector<128x128xbf16>
    %cst_7 = arith.constant dense<0.000000e+00> : vector<16x128xf32>
    %15 = tpu.matmul %13, %14, %cst_7 {dimension_numbers = #tpu.dot_dimension_numbers<[1], [0], [0], [1], [0, 0, 1, 1], [], []>} : vector<16x128xbf16>, vector<128x128xbf16>, vector<16x128xf32> -> vector<16x128xf32>
    %cst_8 = arith.constant 3.125000e-02 : f32
    %16 = vector.broadcast %cst_8 : f32 to vector<16x128xf32>
    %17 = arith.mulf %15, %16 : vector<16x128xf32>
    %cst_9 = arith.constant 9.99999997E-7 : f32
    %18 = vector.broadcast %cst_9 : f32 to vector<16x128xf32>
    %19 = arith.addf %17, %18 : vector<16x128xf32>
    %20 = math.rsqrt %19 : vector<16x128xf32>
    %21 = arith.mulf %11, %20 : vector<16x128xf32>
    %c0_10 = arith.constant 0 : index
    %c0_11 = arith.constant 0 : index
    %22 = vector.load %arg7[%c0_10, %c0_11] : memref<1x128xf32, #tpu.memory_space<vmem>>, vector<1x128xf32>
    %23 = vector.broadcast %22 : vector<1x128xf32> to vector<16x128xf32>
    %24 = arith.mulf %21, %23 : vector<16x128xf32>
    %c0_12 = arith.constant 0 : index
    %c0_13 = arith.constant 0 : index
    %25 = vector.load %arg8[%c0_12, %c0_13] : memref<1x128xf32, #tpu.memory_space<vmem>>, vector<1x128xf32>
    %26 = vector.broadcast %25 : vector<1x128xf32> to vector<16x128xf32>
    %27 = arith.addf %24, %26 : vector<16x128xf32>
    %c0_14 = arith.constant 0 : index
    %c0_15 = arith.constant 0 : index
    %28 = vector.load %arg2[%c0_14, %c0_15] : memref<128x256xf32, #tpu.memory_space<vmem>>, vector<128x256xf32>
    %c0_16 = arith.constant 0 : index
    %c0_17 = arith.constant 0 : index
    %29 = vector.load %arg3[%c0_16, %c0_17] : memref<1x256xf32, #tpu.memory_space<vmem>>, vector<1x256xf32>
    %cst_18 = arith.constant dense<0.000000e+00> : vector<16x256xf32>
    %30 = tpu.matmul %27, %28, %cst_18 {dimension_numbers = #tpu.dot_dimension_numbers<[1], [0], [0], [1], [0, 0, 1, 1], [], []>} : vector<16x128xf32>, vector<128x256xf32>, vector<16x256xf32> -> vector<16x256xf32>
    %31 = vector.broadcast %29 : vector<1x256xf32> to vector<16x256xf32>
    %32 = arith.addf %30, %31 : vector<16x256xf32>
    %cst_19 = arith.constant 0.000000e+00 : f32
    %33 = vector.broadcast %cst_19 : f32 to vector<16x256xf32>
    %34 = arith.maximumf %32, %33 : vector<16x256xf32>
    %c0_20 = arith.constant 0 : index
    %c0_21 = arith.constant 0 : index
    %35 = vector.load %arg4[%c0_20, %c0_21] : memref<256x128xf32, #tpu.memory_space<vmem>>, vector<256x128xf32>
    %c0_22 = arith.constant 0 : index
    %c0_23 = arith.constant 0 : index
    %36 = vector.load %arg5[%c0_22, %c0_23] : memref<1x128xf32, #tpu.memory_space<vmem>>, vector<1x128xf32>
    %cst_24 = arith.constant dense<0.000000e+00> : vector<16x128xf32>
    %37 = tpu.matmul %34, %35, %cst_24 {dimension_numbers = #tpu.dot_dimension_numbers<[1], [0], [0], [1], [0, 0, 1, 1], [], []>} : vector<16x256xf32>, vector<256x128xf32>, vector<16x128xf32> -> vector<16x128xf32>
    %38 = vector.broadcast %36 : vector<1x128xf32> to vector<16x128xf32>
    %39 = arith.addf %37, %38 : vector<16x128xf32>
    %c0_25 = arith.constant 0 : index
    %c0_26 = arith.constant 0 : index
    %40 = vector.load %arg1[%c0_25, %c0_26] : memref<16x128xf32, #tpu.memory_space<vmem>>, vector<16x128xf32>
    %41 = arith.addf %39, %40 : vector<16x128xf32>
    %c0_27 = arith.constant 0 : index
    %c0_28 = arith.constant 0 : index
    %42 = vector.load %arg9[%c0_27, %c0_28] : memref<16x128xf32, #tpu.memory_space<vmem>>, vector<16x128xf32>
    tpu.vector_store %arg9[%c0_27, %c0_28], %41 {strides = array<i32>} : memref<16x128xf32, #tpu.memory_space<vmem>>, vector<16x128xf32>,
    return
  }
  func.func @transform_0(%arg0: i32) -> (i32, i32) {
    %c0_i32 = arith.constant 0 : i32
    %c0_i32_0 = arith.constant 0 : i32
    return %arg0, %c0_i32 : i32, i32
  }
  func.func @transform_1(%arg0: i32) -> (i32, i32) {
    %c0_i32 = arith.constant 0 : i32
    %c0_i32_0 = arith.constant 0 : i32
    %c0_i32_1 = arith.constant 0 : i32
    return %c0_i32, %c0_i32_0 : i32, i32
  }
  func.func @transform_2(%arg0: i32) -> (i32, i32) {
    %c0_i32 = arith.constant 0 : i32
    %c0_i32_0 = arith.constant 0 : i32
    %c0_i32_1 = arith.constant 0 : i32
    return %c0_i32, %c0_i32_0 : i32, i32
  }
  func.func @transform_3(%arg0: i32) -> (i32, i32) {
    %c0_i32 = arith.constant 0 : i32
    %c0_i32_0 = arith.constant 0 : i32
    %c0_i32_1 = arith.constant 0 : i32
    return %c0_i32, %c0_i32_0 : i32, i32
  }
  func.func @transform_4(%arg0: i32) -> (i32, i32) {
    %c0_i32 = arith.constant 0 : i32
    %c0_i32_0 = arith.constant 0 : i32
    %c0_i32_1 = arith.constant 0 : i32
    return %c0_i32, %c0_i32_0 : i32, i32
  }
  func.func @transform_5(%arg0: i32) -> (i32, i32) {
    %c0_i32 = arith.constant 0 : i32
    %c0_i32_0 = arith.constant 0 : i32
    %c0_i32_1 = arith.constant 0 : i32
    return %c0_i32, %c0_i32_0 : i32, i32
  }
  func.func @transform_6(%arg0: i32) -> (i32, i32) {
    %c0_i32 = arith.constant 0 : i32
    %c0_i32_0 = arith.constant 0 : i32
    %c0_i32_1 = arith.constant 0 : i32
    return %c0_i32, %c0_i32_0 : i32, i32
  }
  func.func @transform_7(%arg0: i32) -> (i32, i32) {
    %c0_i32 = arith.constant 0 : i32
    %c0_i32_0 = arith.constant 0 : i32
    %c0_i32_1 = arith.constant 0 : i32
    return %c0_i32, %c0_i32_0 : i32, i32
  }
  func.func @transform_8(%arg0: i32) -> (i32, i32) {
    %c0_i32 = arith.constant 0 : i32
    %c0_i32_0 = arith.constant 0 : i32
    return %arg0, %c0_i32 : i32, i32
  }
}

</mosaic_0001>

<llo_original>
// kernel: tpu_custom_call.1
$region0: #{tpu_custom_call.1}
  #allocation0 [shape = 'u32[]', space=smem, size = 0x4, offset = 0x4, fixed_abs, tag = 'smem constant byte address 0x4 - core index']
  #allocation1 [shape = 'u32[144,128]{1,0:T(1,128)}', space=vmem, size = 0x12000, scoped, tag = 'internal scratch']
  %s0 = inlined_call_operand.hbm [shape: f32[16,128], index: 0, kind: input, shape index: {}]
  %s1 = inlined_call_operand.hbm [shape: f32[128,256], index: 1, kind: input, shape index: {}]
  %s2 = inlined_call_operand.vmem [shape: f32[1,256], index: 2, kind: input, shape index: {}]
  %s3 = inlined_call_operand.hbm [shape: f32[256,128], index: 3, kind: input, shape index: {}]
  %s4 = inlined_call_operand.vmem [shape: f32[1,128], index: 4, kind: input, shape index: {}]
  %s5 = inlined_call_operand.hbm [shape: bf16[128,128], index: 5, kind: input, shape index: {}]
  %s6 = inlined_call_operand.vmem [shape: f32[1,128], index: 6, kind: input, shape index: {}]
  %s7 = inlined_call_operand.vmem [shape: f32[1,128], index: 7, kind: input, shape index: {}]
  %s8 = inlined_call_operand.hbm [shape: f32[16,128], index: 8, kind: output, shape index: {}]
  %s9 = sld [smem:[#allocation0]]
  $region58: #{tpu_custom_call.1} parent=0
    _
  %s11 = ssub.s32 1, %s9
  %s12 = scalar_select 0, %s11, %s9
  $region1: #{tpu_custom_call.1} parent=0
    #allocation2 [shape = 'u8[8192]{0}', space=vmem, size = 0x2000, scoped, tag = 'input window, operand 0, single buffered']
    #allocation3 [shape = 's32[1]{0}', space=sflag, size = 0x4, scoped, tag = 'scoped memory for tpu_custom_call.1']
    #allocation4 [shape = 's32[1]{0}', space=sflag, size = 0x4, scoped, tag = 'scoped memory for tpu_custom_call.1']
    #allocation5 [shape = 'u8[131072]{0}', space=vmem, size = 0x20000, scoped, tag = 'input window, operand 1, single buffered']
    #allocation6 [shape = 's32[1]{0}', space=sflag, size = 0x4, scoped, tag = 'scoped memory for tpu_custom_call.1']
    #allocation7 [shape = 'u8[131072]{0}', space=vmem, size = 0x20000, scoped, tag = 'input window, operand 3, single buffered']
    #allocation8 [shape = 'u8[32768]{0}', space=vmem, size = 0x8000, scoped, tag = 'input window, operand 5, single buffered']
    #allocation9 [shape = 's32[1]{0}', space=sflag, size = 0x4, scoped, tag = 'scoped memory for tpu_custom_call.1']
    #allocation10 [shape = 'u8[8192]{0}', space=vmem, size = 0x2000, scoped, tag = 'output window, operand 0, single buffered']
    %13 = vsyncpa [#allocation3], 0
    %14 = vsyncpa [#allocation6], 0
    %15 = vsyncpa [#allocation9], 0
    %16 = vsyncpa [#allocation4], 0
    // Predicated region
    $region2: #{tpu_custom_call.1} parent=1 // pred_check
      _
    $region3: #{tpu_custom_call.1} parent=1 // pred_check_branch
      %18 = sbr.rel (0) target = $region5
    $region4: #{tpu_custom_call.1} parent=1 // pred_region
      %s20 = ssub.s32 256, 256
      %21 = vsyncadd [#allocation3], %s20
      %s22 = sshll.u32 [#allocation2], 4
      %s23 = int_to_ptr.vmem [resolvable:$true] %s22
      %28 = dma.hbm_to_vmem [thread:$0]  %s0, 256, %s23, [#allocation3], 128, 128, 8
    $region5: #{tpu_custom_call.1} parent=1 // pred_fallthru
      _
    // Predicated region
    $region6: #{tpu_custom_call.1} parent=1 // pred_check
      _
    $region7: #{tpu_custom_call.1} parent=1 // pred_check_branch
      %30 = sbr.rel (0) target = $region9
    $region8: #{tpu_custom_call.1} parent=1 // pred_region
      %s32 = ssub.s32 4096, 4096
      %33 = vsyncadd [#allocation6], %s32
      %s34 = sshll.u32 [#allocation5], 4
      %s35 = int_to_ptr.vmem [resolvable:$true] %s34
      %40 = dma.hbm_to_vmem [thread:$0]  %s1, 4096, %s35, [#allocation6], 256, 256, 16
    $region9: #{tpu_custom_call.1} parent=1 // pred_fallthru
      _
    // Predicated region
    $region10: #{tpu_custom_call.1} parent=1 // pred_check
      _
    $region11: #{tpu_custom_call.1} parent=1 // pred_check_branch
      %42 = sbr.rel (0) target = $region13
    $region12: #{tpu_custom_call.1} parent=1 // pred_region
      _
    $region13: #{tpu_custom_call.1} parent=1 // pred_fallthru
      _
    // Predicated region
    $region14: #{tpu_custom_call.1} parent=1 // pred_check
      _
    $region15: #{tpu_custom_call.1} parent=1 // pred_check_branch
      %44 = sbr.rel (0) target = $region17
    $region16: #{tpu_custom_call.1} parent=1 // pred_region
      %s46 = ssub.s32 4096, 4096
      %47 = vsyncadd [#allocation6], %s46
      %s48 = sshll.u32 [#allocation7], 4
      %s49 = int_to_ptr.vmem [resolvable:$true] %s48
      %54 = dma.hbm_to_vmem [thread:$0]  %s3, 4096, %s49, [#allocation6], 128, 128, 8
    $region17: #{tpu_custom_call.1} parent=1 // pred_fallthru
      _
    // Predicated region
    $region18: #{tpu_custom_call.1} parent=1 // pred_check
      _
    $region19: #{tpu_custom_call.1} parent=1 // pred_check_branch
      %56 = sbr.rel (0) target = $region21
    $region20: #{tpu_custom_call.1} parent=1 // pred_region
      _
    $region21: #{tpu_custom_call.1} parent=1 // pred_fallthru
      _
    // Predicated region
    $region22: #{tpu_custom_call.1} parent=1 // pred_check
      _
    $region23: #{tpu_custom_call.1} parent=1 // pred_check_branch
      %58 = sbr.rel (0) target = $region25
    $region24: #{tpu_custom_call.1} parent=1 // pred_region
      %s60 = ssub.s32 1024, 1024
      %61 = vsyncadd [#allocation9], %s60
      %s62 = sshll.u32 [#allocation8], 4
      %s63 = int_to_ptr.vmem [resolvable:$true] %s62
      %68 = dma.hbm_to_vmem [thread:$0]  %s5, 1024, %s63, [#allocation9], 64, 64, 4
    $region25: #{tpu_custom_call.1} parent=1 // pred_fallthru
      _
    // Predicated region
    $region26: #{tpu_custom_call.1} parent=1 // pred_check
      _
    $region27: #{tpu_custom_call.1} parent=1 // pred_check_branch
      %70 = sbr.rel (0) target = $region29
    $region28: #{tpu_custom_call.1} parent=1 // pred_region
      _
    $region29: #{tpu_custom_call.1} parent=1 // pred_fallthru
      _
    // Predicated region
    $region30: #{tpu_custom_call.1} parent=1 // pred_check
      _
    $region31: #{tpu_custom_call.1} parent=1 // pred_check_branch
      %72 = sbr.rel (0) target = $region33
    $region32: #{tpu_custom_call.1} parent=1 // pred_region
      _
    $region33: #{tpu_custom_call.1} parent=1 // pred_fallthru
      _
    // Predicated region
    $region34: #{tpu_custom_call.1} parent=1 // pred_check
      _
    $region35: #{tpu_custom_call.1} parent=1 // pred_check_branch
      %74 = sbr.rel (0) target = $region37
    $region36: #{tpu_custom_call.1} parent=1 // pred_region
      %75 = dma.done [#allocation3], 256
    $region37: #{tpu_custom_call.1} parent=1 // pred_fallthru
      _
    // Predicated region
    $region38: #{tpu_custom_call.1} parent=1 // pred_check
      _
    $region39: #{tpu_custom_call.1} parent=1 // pred_check_branch
      %77 = sbr.rel (0) target = $region41
    $region40: #{tpu_custom_call.1} parent=1 // pred_region
      %78 = dma.done [#allocation6], 4096
    $region41: #{tpu_custom_call.1} parent=1 // pred_fallthru
      _
    // Predicated region
    $region42: #{tpu_custom_call.1} parent=1 // pred_check
      _
    $region43: #{tpu_custom_call.1} parent=1 // pred_check_branch
      %80 = sbr.rel (0) target = $region45
    $region44: #{tpu_custom_call.1} parent=1 // pred_region
      %81 = dma.done [#allocation6], 4096
    $region45: #{tpu_custom_call.1} parent=1 // pred_fallthru
      _
    // Predicated region
    $region46: #{tpu_custom_call.1} parent=1 // pred_check
      _
    $region47: #{tpu_custom_call.1} parent=1 // pred_check_branch
      %83 = sbr.rel (0) target = $region49
    $region48: #{tpu_custom_call.1} parent=1 // pred_region
      %84 = dma.done [#allocation9], 1024
    $region49: #{tpu_custom_call.1} parent=1 // pred_fallthru
      _
    %v86 = vld [vmem:[#allocation2] sm:$0xff]
    %v87 = vld [vmem:[#allocation2 + $0x8] sm:$0xff]
    %v88 = vld [vmem:[#allocation8] sm:$0xf]
    %v89 = vld [vmem:[#allocation8 + $0x4] sm:$0xf]
    %v90 = vld [vmem:[#allocation8 + $0x8] sm:$0xf]
    %v91 = vld [vmem:[#allocation8 + $0xc] sm:$0xf]
    %v92 = vld [vmem:[#allocation8 + $0x10] sm:$0xf]
    %v93 = vld [vmem:[#allocation8 + $0x14] sm:$0xf]
    %v94 = vld [vmem:[#allocation8 + $0x18] sm:$0xf]
    %v95 = vld [vmem:[#allocation8 + $0x1c] sm:$0xf]
    %v96 = vld [vmem:[#allocation8 + $0x20] sm:$0xf]
    %v97 = vld [vmem:[#allocation8 + $0x24] sm:$0xf]
    %v98 = vld [vmem:[#allocation8 + $0x28] sm:$0xf]
    %v99 = vld [vmem:[#allocation8 + $0x2c] sm:$0xf]
    %v100 = vld [vmem:[#allocation8 + $0x30] sm:$0xf]
    %v101 = vld [vmem:[#allocation8 + $0x34] sm:$0xf]
    %v102 = vld [vmem:[#allocation8 + $0x38] sm:$0xf]
    %v103 = vld [vmem:[#allocation8 + $0x3c] sm:$0xf]
    %v104 = vpack.c.bf16 %v87, %v86
    %v105 = vunpack.c.l.bf16 %v104
    %v106 = vunpack.c.h.bf16 %v104
    %v107 = vsub.f32 %v86, %v105
    %v108 = vsub.f32 %v87, %v106
    %v109 = vpack.c.bf16 %v108, %v107
    %v126 = vunpack.c.l.b16 %v88
    %v127 = vunpack.c.l.b16 %v89
    %v128 = vunpack.c.l.b16 %v90
    %v129 = vunpack.c.l.b16 %v91
    %v130 = vunpack.c.l.b16 %v92
    %v131 = vunpack.c.l.b16 %v93
    %v132 = vunpack.c.l.b16 %v94
    %v133 = vunpack.c.l.b16 %v95
    %v134 = vunpack.c.l.b16 %v96
    %v135 = vunpack.c.l.b16 %v97
    %v136 = vunpack.c.l.b16 %v98
    %v137 = vunpack.c.l.b16 %v99
    %v138 = vunpack.c.l.b16 %v100
    %v139 = vunpack.c.l.b16 %v101
    %v140 = vunpack.c.l.b16 %v102
    %v141 = vunpack.c.l.b16 %v103
    %v142 = vpack.c.b16 %v127, %v126
    %v143 = vpack.c.b16 %v129, %v128
    %v144 = vpack.c.b16 %v131, %v130
    %v145 = vpack.c.b16 %v133, %v132
    %v146 = vpack.c.b16 %v135, %v134
    %v147 = vpack.c.b16 %v137, %v136
    %v148 = vpack.c.b16 %v139, %v138
    %v149 = vpack.c.b16 %v141, %v140
    %158 = vmatprep.subr.bf16.mxu0 0
    %159 = vmatpush1.bf16.msra.mxu0 %v142
    %160 = vmatprep.subr.bf16.mxu0 0
    %161 = vmatpush1.bf16.msra.mxu0 %v143
    %162 = vmatprep.subr.bf16.mxu0 0
    %163 = vmatpush1.bf16.msra.mxu0 %v144
    %164 = vmatprep.subr.bf16.mxu0 0
    %165 = vmatpush1.bf16.msra.mxu0 %v145
    %166 = vmatprep.subr.bf16.mxu0 0
    %167 = vmatpush1.bf16.msra.mxu0 %v146
    %168 = vmatprep.subr.bf16.mxu0 0
    %169 = vmatpush1.bf16.msra.mxu0 %v147
    %170 = vmatprep.subr.bf16.mxu0 0
    %171 = vmatpush1.bf16.msra.mxu0 %v148
    %172 = vmatprep.subr.bf16.mxu0 0
    %173 = vmatpush1.bf16.msra.mxu0 %v149
    %174 = vmatprep.subr.bf16.mxu0 0
    %175 = vmatpush1.bf16.msra.mxu0 0
    %176 = vmatprep.subr.bf16.mxu0 0
    %177 = vmatpush1.bf16.msra.mxu0 0
    %178 = vmatprep.subr.bf16.mxu0 0
    %179 = vmatpush1.bf16.msra.mxu0 0
    %180 = vmatprep.subr.bf16.mxu0 0
    %181 = vmatpush1.bf16.msra.mxu0 0
    %182 = vmatprep.subr.bf16.mxu0 0
    %183 = vmatpush1.bf16.msra.mxu0 0
    %184 = vmatprep.subr.bf16.mxu0 0
    %185 = vmatpush1.bf16.msra.mxu0 0
    %186 = vmatprep.subr.bf16.mxu0 0
    %187 = vmatpush1.bf16.msra.mxu0 0
    %188 = vmatprep.subr.bf16.mxu0 0
    %189 = vmatpush1.bf16.msra.mxu0 0
    %190 = vmatprep.mubr.bf16.mxu0 0
    %191 = vmatmul.mubr.bf16.gmra.mrb[0].mxu0 %v109
    %v192 = vpop.f32.mrb[0].mxu0
    %v193 = vadd.f32 0.0, %v192
    %v194 = vpop.f32.mrb[0].mxu0
    %v195 = vpop.f32.mrb[0].mxu0
    %v196 = vadd.f32 0.0, %v195
    %v197 = vpop.f32.mrb[0].mxu0
    %198 = vdwg.mxu0
    %199 = vmatprep.subr.bf16.mxu0 0
    %200 = vmatpush1.bf16.msra.mxu0 %v142
    %201 = vmatprep.subr.bf16.mxu0 0
    %202 = vmatpush1.bf16.msra.mxu0 %v143
    %203 = vmatprep.subr.bf16.mxu0 0
    %204 = vmatpush1.bf16.msra.mxu0 %v144
    %205 = vmatprep.subr.bf16.mxu0 0
    %206 = vmatpush1.bf16.msra.mxu0 %v145
    %207 = vmatprep.subr.bf16.mxu0 0
    %208 = vmatpush1.bf16.msra.mxu0 %v146
    %209 = vmatprep.subr.bf16.mxu0 0
    %210 = vmatpush1.bf16.msra.mxu0 %v147
    %211 = vmatprep.subr.bf16.mxu0 0
    %212 = vmatpush1.bf16.msra.mxu0 %v148
    %213 = vmatprep.subr.bf16.mxu0 0
    %214 = vmatpush1.bf16.msra.mxu0 %v149
    %215 = vmatprep.subr.bf16.mxu0 0
    %216 = vmatpush1.bf16.msra.mxu0 0
    %217 = vmatprep.subr.bf16.mxu0 0
    %218 = vmatpush1.bf16.msra.mxu0 0
    %219 = vmatprep.subr.bf16.mxu0 0
    %220 = vmatpush1.bf16.msra.mxu0 0
    %221 = vmatprep.subr.bf16.mxu0 0
    %222 = vmatpush1.bf16.msra.mxu0 0
    %223 = vmatprep.subr.bf16.mxu0 0
    %224 = vmatpush1.bf16.msra.mxu0 0
    %225 = vmatprep.subr.bf16.mxu0 0
    %226 = vmatpush1.bf16.msra.mxu0 0
    %227 = vmatprep.subr.bf16.mxu0 0
    %228 = vmatpush1.bf16.msra.mxu0 0
    %229 = vmatprep.subr.bf16.mxu0 0
    %230 = vmatpush1.bf16.msra.mxu0 0
    %231 = vmatprep.mubr.bf16.mxu0 0
    %232 = vmatmul.mubr.bf16.gmra.mrb[0].mxu0 %v104
    %v233 = vpop.f32.mrb[0].mxu0
    %v234 = vadd.f32 %v193, %v233
    %v235 = vpop.f32.mrb[0].mxu0
    %v236 = vpop.f32.mrb[0].mxu0
    %v237 = vadd.f32 %v196, %v236
    %v238 = vpop.f32.mrb[0].mxu0
    %239 = vdwg.mxu0
    %v240 = vmul.f32 %v234, 0.03125
    %v241 = vmul.f32 %v237, 0.03125
    %v242 = vsub.f32 %v86, %v240
    %v243 = vsub.f32 %v87, %v241
    %v244 = vmul.f32 %v242, %v242
    %v245 = vmul.f32 %v243, %v243
    %v246 = vpack.c.bf16 %v245, %v244
    %247 = vmatprep.subr.bf16.mxu0 0
    %248 = vmatpush1.bf16.msra.mxu0 %v142
    %249 = vmatprep.subr.bf16.mxu0 0
    %250 = vmatpush1.bf16.msra.mxu0 %v143
    %251 = vmatprep.subr.bf16.mxu0 0
    %252 = vmatpush1.bf16.msra.mxu0 %v144
    %253 = vmatprep.subr.bf16.mxu0 0
    %254 = vmatpush1.bf16.msra.mxu0 %v145
    %255 = vmatprep.subr.bf16.mxu0 0
    %256 = vmatpush1.bf16.msra.mxu0 %v146
    %257 = vmatprep.subr.bf16.mxu0 0
    %258 = vmatpush1.bf16.msra.mxu0 %v147
    %259 = vmatprep.subr.bf16.mxu0 0
    %260 = vmatpush1.bf16.msra.mxu0 %v148
    %261 = vmatprep.subr.bf16.mxu0 0
    %262 = vmatpush1.bf16.msra.mxu0 %v149
    %263 = vmatprep.subr.bf16.mxu0 0
    %264 = vmatpush1.bf16.msra.mxu0 0
    %265 = vmatprep.subr.bf16.mxu0 0
    %266 = vmatpush1.bf16.msra.mxu0 0
    %267 = vmatprep.subr.bf16.mxu0 0
    %268 = vmatpush1.bf16.msra.mxu0 0
    %269 = vmatprep.subr.bf16.mxu0 0
    %270 = vmatpush1.bf16.msra.mxu0 0
    %271 = vmatprep.subr.bf16.mxu0 0
    %272 = vmatpush1.bf16.msra.mxu0 0
    %273 = vmatprep.subr.bf16.mxu0 0
    %274 = vmatpush1.bf16.msra.mxu0 0
    %275 = vmatprep.subr.bf16.mxu0 0
    %276 = vmatpush1.bf16.msra.mxu0 0
    %277 = vmatprep.subr.bf16.mxu0 0
    %278 = vmatpush1.bf16.msra.mxu0 0
    %279 = vmatprep.mubr.bf16.mxu0 0
    %280 = vmatmul.mubr.bf16.gmra.mrb[0].mxu0 %v246
    %v281 = vpop.f32.mrb[0].mxu0
    %v282 = vadd.f32 0.0, %v281
    %v283 = vpop.f32.mrb[0].mxu0
    %v284 = vpop.f32.mrb[0].mxu0
    %v285 = vadd.f32 0.0, %v284
    %v286 = vpop.f32.mrb[0].mxu0
    %287 = vdwg.mxu0
    %v288 = vmul.f32 %v282, 0.03125
    %v289 = vmul.f32 %v285, 0.03125
    %v290 = vadd.f32 %v288, 1e-06
    %v291 = vadd.f32 %v289, 1e-06
    %v292 = vrsqrt.pop %v290
    %v293 = vrsqrt.pop %v291
    %v294 = vmul.f32 %v242, %v292
    %v295 = vmul.f32 %v243, %v293
    %v296 = vld [vmem:[%s6] sm:$0x1]
    %v298 = vlaneseq
    %v299 = vshrl.u32 %v298, 7
    %v300 = vsub.s32 0, %v299
    %v301 = vrot.slane %v296, %v300
    %v303 = vmul.f32 %v294, %v301
    %v304 = vmul.f32 %v295, %v301
    %v305 = vld [vmem:[%s7] sm:$0x1]
    %v307 = vlaneseq
    %v308 = vshrl.u32 %v307, 7
    %v309 = vsub.s32 0, %v308
    %v310 = vrot.slane %v305, %v309
    %v312 = vadd.f32 %v303, %v310
    %v313 = vadd.f32 %v304, %v310
    %v314 = vld [vmem:[#allocation5] sm:$0xff]
    %v315 = vld [vmem:[#allocation5 + $0x8] sm:$0xff]
    %v316 = vld [vmem:[#allocation5 + $0x10] sm:$0xff]
    %v317 = vld [vmem:[#allocation5 + $0x18] sm:$0xff]
    %v318 = vld [vmem:[#allocation5 + $0x20] sm:$0xff]
    %v319 = vld [vmem:[#allocation5 + $0x28] sm:$0xff]
    %v320 = vld [vmem:[#allocation5 + $0x30] sm:$0xff]
    %v321 = vld [vmem:[#allocation5 + $0x38] sm:$0xff]
    %v322 = vld [vmem:[#allocation5 + $0x40] sm:$0xff]
    %v323 = vld [vmem:[#allocation5 + $0x48] sm:$0xff]
    %v324 = vld [vmem:[#allocation5 + $0x50] sm:$0xff]
    %v325 = vld [vmem:[#allocation5 + $0x58] sm:$0xff]
    %v326 = vld [vmem:[#allocation5 + $0x60] sm:$0xff]
    %v327 = vld [vmem:[#allocation5 + $0x68] sm:$0xff]
    %v328 = vld [vmem:[#allocation5 + $0x70] sm:$0xff]
    %v329 = vld [vmem:[#allocation5 + $0x78] sm:$0xff]
    %v330 = vld [vmem:[#allocation5 + $0x80] sm:$0xff]
    %v331 = vld [vmem:[#allocation5 + $0x88] sm:$0xff]
    %v332 = vld [vmem:[#allocation5 + $0x90] sm:$0xff]
    %v333 = vld [vmem:[#allocation5 + $0x98] sm:$0xff]
    %v334 = vld [vmem:[#allocation5 + $0xa0] sm:$0xff]
    %v335 = vld [vmem:[#allocation5 + $0xa8] sm:$0xff]
    %v336 = vld [vmem:[#allocation5 + $0xb0] sm:$0xff]
    %v337 = vld [vmem:[#allocation5 + $0xb8] sm:$0xff]
    %v338 = vld [vmem:[#allocation5 + $0xc0] sm:$0xff]
    %v339 = vld [vmem:[#allocation5 + $0xc8] sm:$0xff]
    %v340 = vld [vmem:[#allocation5 + $0xd0] sm:$0xff]
    %v341 = vld [vmem:[#allocation5 + $0xd8] sm:$0xff]
    %v342 = vld [vmem:[#allocation5 + $0xe0] sm:$0xff]
    %v343 = vld [vmem:[#allocation5 + $0xe8] sm:$0xff]
    %v344 = vld [vmem:[#allocation5 + $0xf0] sm:$0xff]
    %v345 = vld [vmem:[#allocation5 + $0xf8] sm:$0xff]
    %v346 = vld [vmem:[%s2] sm:$0x3]
    %v348 = vlaneseq
    %v349 = vshrl.u32 %v348, 7
    %v350 = vsub.s32 0, %v349
    %v351 = vrot.slane %v346, %v350
    %v352 = vlaneseq
    %v353 = vshrl.u32 %v352, 7
    %v354 = vsub.s32 1, %v353
    %v355 = vrot.slane %v346, %v354
    %358 = vmatprep.subr.mxu0 %v315
    %359 = vmatpush1.msra.mxu0 %v314
    %360 = vmatprep.subr.mxu0 %v317
    %361 = vmatpush1.msra.mxu0 %v316
    %362 = vmatprep.subr.mxu0 %v319
    %363 = vmatpush1.msra.mxu0 %v318
    %364 = vmatprep.subr.mxu0 %v321
    %365 = vmatpush1.msra.mxu0 %v320
    %366 = vmatprep.subr.mxu0 %v323
    %367 = vmatpush1.msra.mxu0 %v322
    %368 = vmatprep.subr.mxu0 %v325
    %369 = vmatpush1.msra.mxu0 %v324
    %370 = vmatprep.subr.mxu0 %v327
    %371 = vmatpush1.msra.mxu0 %v326
    %372 = vmatprep.subr.mxu0 %v329
    %373 = vmatpush1.msra.mxu0 %v328
    %374 = vmatprep.subr.mxu0 %v331
    %375 = vmatpush1.msra.mxu0 %v330
    %376 = vmatprep.subr.mxu0 %v333
    %377 = vmatpush1.msra.mxu0 %v332
    %378 = vmatprep.subr.mxu0 %v335
    %379 = vmatpush1.msra.mxu0 %v334
    %380 = vmatprep.subr.mxu0 %v337
    %381 = vmatpush1.msra.mxu0 %v336
    %382 = vmatprep.subr.mxu0 %v339
    %383 = vmatpush1.msra.mxu0 %v338
    %384 = vmatprep.subr.mxu0 %v341
    %385 = vmatpush1.msra.mxu0 %v340
    %386 = vmatprep.subr.mxu0 %v343
    %387 = vmatpush1.msra.mxu0 %v342
    %388 = vmatprep.subr.mxu0 %v345
    %389 = vmatpush1.msra.mxu0 %v344
    %390 = vmatprep.subr.mxu0 0.0
    %391 = vmatpush1.msra.mxu0 0.0
    %392 = vmatprep.subr.mxu0 0.0
    %393 = vmatpush1.msra.mxu0 0.0
    %394 = vmatprep.subr.mxu0 0.0
    %395 = vmatpush1.msra.mxu0 0.0
    %396 = vmatprep.subr.mxu0 0.0
    %397 = vmatpush1.msra.mxu0 0.0
    %398 = vmatprep.subr.mxu0 0.0
    %399 = vmatpush1.msra.mxu0 0.0
    %400 = vmatprep.subr.mxu0 0.0
    %401 = vmatpush1.msra.mxu0 0.0
    %402 = vmatprep.subr.mxu0 0.0
    %403 = vmatpush1.msra.mxu0 0.0
    %404 = vmatprep.subr.mxu0 0.0
    %405 = vmatpush1.msra.mxu0 0.0
    %406 = vmatprep.subr.mxu0 0.0
    %407 = vmatpush1.msra.mxu0 0.0
    %408 = vmatprep.subr.mxu0 0.0
    %409 = vmatpush1.msra.mxu0 0.0
    %410 = vmatprep.subr.mxu0 0.0
    %411 = vmatpush1.msra.mxu0 0.0
    %412 = vmatprep.subr.mxu0 0.0
    %413 = vmatpush1.msra.mxu0 0.0
    %414 = vmatprep.subr.mxu0 0.0
    %415 = vmatpush1.msra.mxu0 0.0
    %416 = vmatprep.subr.mxu0 0.0
    %417 = vmatpush1.msra.mxu0 0.0
    %418 = vmatprep.subr.mxu0 0.0
    %419 = vmatpush1.msra.mxu0 0.0
    %420 = vmatprep.subr.mxu0 0.0
    %421 = vmatpush1.msra.mxu0 0.0
    %422 = vmatprep.mubr.f32.mxu0 0.0
    %423 = vmatmul.mubr.f32.gmra.mrb[0].mxu0 %v312
    %v424 = vpop.f32.mrb[0].mxu0
    %v425 = vadd.f32 %v351, %v424
    %v426 = vpop.f32.mrb[0].mxu0
    %v427 = vadd.f32 %v355, %v426
    %428 = vmatprep.mubr.f32.mxu0 0.0
    %429 = vmatmul.mubr.f32.gmra.mrb[0].mxu0 %v313
    %v430 = vpop.f32.mrb[0].mxu0
    %v431 = vadd.f32 %v351, %v430
    %v432 = vpop.f32.mrb[0].mxu0
    %v433 = vadd.f32 %v355, %v432
    %434 = vdwg.mxu0
    %v435 = vmax.f32 %v425, 0.0
    %v436 = vmax.f32 %v427, 0.0
    %v437 = vmax.f32 %v431, 0.0
    %v438 = vmax.f32 %v433, 0.0
    %v439 = vld [vmem:[#allocation7] sm:$0xff]
    %v440 = vld [vmem:[#allocation7 + $0x8] sm:$0xff]
    %v441 = vld [vmem:[#allocation7 + $0x10] sm:$0xff]
    %v442 = vld [vmem:[#allocation7 + $0x18] sm:$0xff]
    %v443 = vld [vmem:[#allocation7 + $0x20] sm:$0xff]
    %v444 = vld [vmem:[#allocation7 + $0x28] sm:$0xff]
    %v445 = vld [vmem:[#allocation7 + $0x30] sm:$0xff]
    %v446 = vld [vmem:[#allocation7 + $0x38] sm:$0xff]
    %v447 = vld [vmem:[#allocation7 + $0x40] sm:$0xff]
    %v448 = vld [vmem:[#allocation7 + $0x48] sm:$0xff]
    %v449 = vld [vmem:[#allocation7 + $0x50] sm:$0xff]
    %v450 = vld [vmem:[#allocation7 + $0x58] sm:$0xff]
    %v451 = vld [vmem:[#allocation7 + $0x60] sm:$0xff]
    %v452 = vld [vmem:[#allocation7 + $0x68] sm:$0xff]
    %v453 = vld [vmem:[#allocation7 + $0x70] sm:$0xff]
    %v454 = vld [vmem:[#allocation7 + $0x78] sm:$0xff]
    %v455 = vld [vmem:[#allocation7 + $0x80] sm:$0xff]
    %v456 = vld [vmem:[#allocation7 + $0x88] sm:$0xff]
    %v457 = vld [vmem:[#allocation7 + $0x90] sm:$0xff]
    %v458 = vld [vmem:[#allocation7 + $0x98] sm:$0xff]
    %v459 = vld [vmem:[#allocation7 + $0xa0] sm:$0xff]
    %v460 = vld [vmem:[#allocation7 + $0xa8] sm:$0xff]
    %v461 = vld [vmem:[#allocation7 + $0xb0] sm:$0xff]
    %v462 = vld [vmem:[#allocation7 + $0xb8] sm:$0xff]
    %v463 = vld [vmem:[#allocation7 + $0xc0] sm:$0xff]
    %v464 = vld [vmem:[#allocation7 + $0xc8] sm:$0xff]
    %v465 = vld [vmem:[#allocation7 + $0xd0] sm:$0xff]
    %v466 = vld [vmem:[#allocation7 + $0xd8] sm:$0xff]
    %v467 = vld [vmem:[#allocation7 + $0xe0] sm:$0xff]
    %v468 = vld [vmem:[#allocation7 + $0xe8] sm:$0xff]
    %v469 = vld [vmem:[#allocation7 + $0xf0] sm:$0xff]
    %v470 = vld [vmem:[#allocation7 + $0xf8] sm:$0xff]
    %v471 = vld [vmem:[%s4] sm:$0x1]
    %v473 = vlaneseq
    %v474 = vshrl.u32 %v473, 7
    %v475 = vsub.s32 0, %v474
    %v476 = vrot.slane %v471, %v475
    %478 = vmatprep.subr.mxu0 0.0
    %479 = vmatpush1.msra.mxu0 %v439
    %480 = vmatprep.subr.mxu0 0.0
    %481 = vmatpush1.msra.mxu0 %v440
    %482 = vmatprep.subr.mxu0 0.0
    %483 = vmatpush1.msra.mxu0 %v441
    %484 = vmatprep.subr.mxu0 0.0
    %485 = vmatpush1.msra.mxu0 %v442
    %486 = vmatprep.subr.mxu0 0.0
    %487 = vmatpush1.msra.mxu0 %v443
    %488 = vmatprep.subr.mxu0 0.0
    %489 = vmatpush1.msra.mxu0 %v444
    %490 = vmatprep.subr.mxu0 0.0
    %491 = vmatpush1.msra.mxu0 %v445
    %492 = vmatprep.subr.mxu0 0.0
    %493 = vmatpush1.msra.mxu0 %v446
    %494 = vmatprep.subr.mxu0 0.0
    %495 = vmatpush1.msra.mxu0 %v447
    %496 = vmatprep.subr.mxu0 0.0
    %497 = vmatpush1.msra.mxu0 %v448
    %498 = vmatprep.subr.mxu0 0.0
    %499 = vmatpush1.msra.mxu0 %v449
    %500 = vmatprep.subr.mxu0 0.0
    %501 = vmatpush1.msra.mxu0 %v450
    %502 = vmatprep.subr.mxu0 0.0
    %503 = vmatpush1.msra.mxu0 %v451
    %504 = vmatprep.subr.mxu0 0.0
    %505 = vmatpush1.msra.mxu0 %v452
    %506 = vmatprep.subr.mxu0 0.0
    %507 = vmatpush1.msra.mxu0 %v453
    %508 = vmatprep.subr.mxu0 0.0
    %509 = vmatpush1.msra.mxu0 %v454
    %510 = vmatprep.subr.mxu0 0.0
    %511 = vmatpush1.msra.mxu0 %v455
    %512 = vmatprep.subr.mxu0 0.0
    %513 = vmatpush1.msra.mxu0 %v456
    %514 = vmatprep.subr.mxu0 0.0
    %515 = vmatpush1.msra.mxu0 %v457
    %516 = vmatprep.subr.mxu0 0.0
    %517 = vmatpush1.msra.mxu0 %v458
    %518 = vmatprep.subr.mxu0 0.0
    %519 = vmatpush1.msra.mxu0 %v459
    %520 = vmatprep.subr.mxu0 0.0
    %521 = vmatpush1.msra.mxu0 %v460
    %522 = vmatprep.subr.mxu0 0.0
    %523 = vmatpush1.msra.mxu0 %v461
    %524 = vmatprep.subr.mxu0 0.0
    %525 = vmatpush1.msra.mxu0 %v462
    %526 = vmatprep.subr.mxu0 0.0
    %527 = vmatpush1.msra.mxu0 %v463
    %528 = vmatprep.subr.mxu0 0.0
    %529 = vmatpush1.msra.mxu0 %v464
    %530 = vmatprep.subr.mxu0 0.0
    %531 = vmatpush1.msra.mxu0 %v465
    %532 = vmatprep.subr.mxu0 0.0
    %533 = vmatpush1.msra.mxu0 %v466
    %534 = vmatprep.subr.mxu0 0.0
    %535 = vmatpush1.msra.mxu0 %v467
    %536 = vmatprep.subr.mxu0 0.0
    %537 = vmatpush1.msra.mxu0 %v468
    %538 = vmatprep.subr.mxu0 0.0
    %539 = vmatpush1.msra.mxu0 %v469
    %540 = vmatprep.subr.mxu0 0.0
    %541 = vmatpush1.msra.mxu0 %v470
    %542 = vmatprep.mubr.f32.mxu0 %v436
    %543 = vmatmul.mubr.f32.gmra.mrb[0].mxu0 %v435
    %v544 = vpop.f32.mrb[0].mxu0
    %v545 = vadd.f32 %v476, %v544
    %v546 = vpop.f32.mrb[0].mxu0
    %547 = vmatprep.mubr.f32.mxu0 %v438
    %548 = vmatmul.mubr.f32.gmra.mrb[0].mxu0 %v437
    %v549 = vpop.f32.mrb[0].mxu0
    %v550 = vadd.f32 %v476, %v549
    %v551 = vpop.f32.mrb[0].mxu0
    %552 = vdwg.mxu0
    %v553 = vadd.f32 %v545, %v86
    %v554 = vadd.f32 %v550, %v87
    %555 = vst [vmem:[#allocation10] sm:$0xff] %v553
    %556 = vst [vmem:[#allocation10 + $0x8] sm:$0xff] %v554
    // Predicated region
    $region50: #{tpu_custom_call.1} parent=1 // pred_check
      _
    $region51: #{tpu_custom_call.1} parent=1 // pred_check_branch
      %558 = sbr.rel (0) target = $region53
    $region52: #{tpu_custom_call.1} parent=1 // pred_region
      %s560 = ssub.s32 256, 256
      %561 = vsyncadd [#allocation4], %s560
      %s562 = sshll.u32 [#allocation10], 4
      %s563 = int_to_ptr.vmem [resolvable:$true] %s562
      %568 = dma.vmem_to_hbm [thread:$0]  %s563, 256, %s8, [#allocation4], 128, 128, 8
    $region53: #{tpu_custom_call.1} parent=1 // pred_fallthru
      _
    // Predicated region
    $region54: #{tpu_custom_call.1} parent=1 // pred_check
      _
    $region55: #{tpu_custom_call.1} parent=1 // pred_check_branch
      %570 = sbr.rel (0) target = $region57
    $region56: #{tpu_custom_call.1} parent=1 // pred_region
      %571 = dma.done [#allocation4], 256
    $region57: #{tpu_custom_call.1} parent=1 // pred_fallthru
      _
    %572 = vsyncpa [#allocation3], 1
    %573 = vsyncpa [#allocation6], 1
    %574 = vsyncpa [#allocation9], 1
    %575 = vsyncpa [#allocation4], 1

</llo_original>
